<compile_context>
chip_gen: v7x
topology: tpu7x:2x2x1
jax: 0.10.0
libtpu: 0.0.40
codegen_flags: <defaults>
</compile_context>

<pallas_src>
import math
import jax
import jax.numpy as jnp
from jax import lax
from jax.experimental import pallas as pl
from jax.experimental.pallas import tpu as pltpu


def _gaussian_window1d(window_size: int, sigma: float) -> list[float]:
    """Python-float 1D Gaussian window; matches GaussianFilter2D._get_gaussian_window1d."""
    half = window_size // 2
    w = [math.exp(-0.5 * (i - half) ** 2 / (sigma * sigma)) for i in range(window_size)]
    s = sum(w)
    return [v / s for v in w]


def _round_up(x: int, m: int) -> int:
    return (x + m - 1) // m * m


def _make_blur_kernel(L: int, Lout: int, K: int, pad: int, top: int,
                      rows: int, w1: list[float]):
    """K-tap zero-padded blur along the leading (sublane) axis of a lane-dense slab."""
    base = top - pad            # scratch row read by tap 0 of output row 0 (>= 0)
    bot0 = top + L              # first bottom-border row (multiple of 8)

    def kernel(x_ref, o_ref, xp_ref):
        # x_ref : (L,    lanes)  input lane-chunk
        # o_ref : (Lout, lanes)  output lane-chunk
        # xp_ref: (rows, lanes)  f32 scratch; interior lives at rows [top, top+L)
        lanes = xp_ref.shape[1]

        # Zero only the pad border strips (not the whole scratch); both strips are
        # 8-row aligned so each is a handful of unmasked vreg stores.
        if top > 0:
            xp_ref[0:top, :] = jnp.zeros((top, lanes), jnp.float32)
        if rows - bot0 > 0:
            xp_ref[bot0:rows, :] = jnp.zeros((rows - bot0, lanes), jnp.float32)

        # Interior copy: sublane offset `top` is a multiple of 8, lane offset 0 ->
        # aligned, unmasked stores.  Single upcast point for sub-f32 inputs.
        xp_ref[top:top + L, :] = x_ref[...].astype(jnp.float32)

        # K-tap blur: each tap is a sublane-offset Ref load (shifted vld that co-issues
        # with the VPU MACs); weights are compile-time float immediates.  acc occupies
        # only ceil(Lout/8)*(lanes/128) vregs, so this unrolled chain cannot spill.
        acc = w1[0] * xp_ref[base:base + Lout, :]
        for k in range(1, K):
            acc = acc + w1[k] * xp_ref[base + k:base + k + Lout, :]
        o_ref[...] = acc.astype(o_ref.dtype)

    return kernel


def _blur_axis0(x2d: jnp.ndarray, K: int, pad: int, w1: list[float], out_dtype):
    """Zero-padded K-tap Gaussian blur along axis 0 of a (L, lanes) slab."""
    L, lanes = x2d.shape
    Lout = L + 2 * pad - K + 1

    # Interior placed at an 8-aligned sublane offset; scratch rows rounded up to 8.
    top = _round_up(pad, 8)
    rows = _round_up(top + L + pad, 8)

    # Lane chunking: keep the block's last dim a multiple of 128 (lane-dense, unmasked
    # stores); grow the chunk a bit to amortize the ~0.35us/step pipeline overhead.
    if lanes % 128 == 0:
        lane_chunk = 128
        while lane_chunk < 512 and lanes % (lane_chunk * 2) == 0:
            lane_chunk *= 2
    else:
        lane_chunk = lanes               # full-extent block (legal fallback)
    grid = (lanes // lane_chunk,)

    kernel = _make_blur_kernel(L, Lout, K, pad, top, rows, w1)

    return pl.pallas_call(
        kernel,
        out_shape=jax.ShapeDtypeStruct((Lout, lanes), out_dtype),
        grid_spec=pltpu.PrefetchScalarGridSpec(
            num_scalar_prefetch=0,
            grid=grid,
            in_specs=[pl.BlockSpec((L, lane_chunk), lambda j: (0, j))],
            out_specs=pl.BlockSpec((Lout, lane_chunk), lambda j: (0, j)),
            scratch_shapes=[pltpu.VMEM((rows, lane_chunk), jnp.float32)],
        ),
        compiler_params=pltpu.CompilerParams(
            dimension_semantics=("parallel",),
        ),
        cost_estimate=pl.CostEstimate(
            flops=2 * K * Lout * lanes,
            transcendentals=0,
            bytes_accessed=L * lanes * x2d.dtype.itemsize
            + Lout * lanes * jnp.dtype(out_dtype).itemsize,
        ),
    )(x2d)


def gaussian_filter2d(x: jnp.ndarray,
                      window_size: int = 11,
                      sigma: float = 1.5,
                      padding: int | None = None) -> jnp.ndarray:
    """Equivalent of GaussianFilter2D(window_size, in_channels=C, sigma, padding,
    ensemble_kernel=True).forward(x) for NCHW input.

    The ensembled 2D window is the outer product of the 1D window with itself, so the
    depthwise conv2d factors exactly into two zero-padded 1D passes (H then W)."""
    if window_size % 2 != 1:
        raise ValueError("Window size must be odd.")
    pad = window_size // 2 if padding is None else padding
    K = window_size
    N, C, H, W = x.shape
    Ho = H + 2 * pad - K + 1
    Wo = W + 2 * pad - K + 1

    w1 = _gaussian_window1d(K, sigma)    # Python floats -> compile-time immediates

    # ---- pass 1: blur along H; lane axis = N*C*W (layout plumbing only) ----
    xt = jnp.transpose(x, (2, 0, 1, 3)).reshape(H, N * C * W)
    t = _blur_axis0(xt, K, pad, w1, out_dtype=jnp.float32)          # (Ho, N*C*W)

    # ---- pass 2: blur along W; lane axis = N*C*Ho ----
    t = t.reshape(Ho, N, C, W)
    t = jnp.transpose(t, (3, 1, 2, 0)).reshape(W, N * C * Ho)
    y = _blur_axis0(t, K, pad, w1, out_dtype=x.dtype)               # (Wo, N*C*Ho)

    y = y.reshape(Wo, N, C, Ho)
    return jnp.transpose(y, (1, 2, 3, 0))                           # (N, C, Ho, Wo)


def _reference(x, window_size=11, sigma=1.5, padding=None):
    """Pure-JAX reference: depthwise conv2d with the ensembled 2D Gaussian window."""
    pad = window_size // 2 if padding is None else padding
    N, C, H, W = x.shape
    half = window_size // 2
    xs = jnp.arange(-half, half + 1, dtype=jnp.float32)
    w1 = jnp.exp(-0.5 * xs * xs / (sigma * sigma))
    w1 = w1 / jnp.sum(w1)
    w2 = jnp.outer(w1, w1)
    w = jnp.broadcast_to(w2, (C, 1, window_size, window_size)).astype(jnp.float32)
    return lax.conv_general_dilated(
        x, w,
        window_strides=(1, 1),
        padding=[(pad, pad), (pad, pad)],
        dimension_numbers=("NCHW", "OIHW", "NCHW"),
        feature_group_count=C,
    )


if __name__ == "__main__":
    key = jax.random.PRNGKey(0)
    N, C, H, W = 2, 4, 16, 16
    x = jax.random.normal(key, (N, C, H, W), dtype=jnp.float32)

    y = gaussian_filter2d(x, window_size=11, sigma=1.5, padding=None)
    y = jax.block_until_ready(y)

    y_ref = _reference(x, window_size=11, sigma=1.5, padding=None)
    assert y.shape == y_ref.shape, (y.shape, y_ref.shape)
    max_err = float(jnp.max(jnp.abs(y - y_ref)))
    assert max_err < 1e-4, f"max abs error {max_err}"

    print("KERNEL_OK")
</pallas_src>

<mosaic_0001>
module attributes {stable_mosaic.version = 11 : i64} {
  func.func @kernel(%arg0: i32, %arg1: memref<16x128xf32, #tpu.memory_space<vmem>>, %arg2: memref<16x128xf32, #tpu.memory_space<vmem>>, %arg3: memref<32x128xf32, #tpu.memory_space<vmem>>) attributes {dimension_semantics = [#tpu.dimension_semantics<parallel>], iteration_bounds = array<i64: 1>, scalar_prefetch = 0 : i64, scratch_operands = 1 : i64, tpu.core_type = #tpu.core_type<tc>, window_params = [{transform_indices = @transform_0, window_bounds = array<i64: 16, 128>}, {transform_indices = @transform_1, window_bounds = array<i64: 16, 128>}]} {
    %cst = arith.constant 0.000000e+00 : f32
    %0 = vector.broadcast %cst : f32 to vector<8x128xf32>
    %c0 = arith.constant 0 : index
    %c0_0 = arith.constant 0 : index
    %1 = vector.load %arg3[%c0, %c0_0] : memref<32x128xf32, #tpu.memory_space<vmem>>, vector<8x128xf32>
    tpu.vector_store %arg3[%c0, %c0_0], %0 {strides = array<i32>} : memref<32x128xf32, #tpu.memory_space<vmem>>, vector<8x128xf32>,
    %cst_1 = arith.constant 0.000000e+00 : f32
    %2 = vector.broadcast %cst_1 : f32 to vector<8x128xf32>
    %c24 = arith.constant 24 : index
    %c0_2 = arith.constant 0 : index
    %3 = vector.load %arg3[%c24, %c0_2] : memref<32x128xf32, #tpu.memory_space<vmem>>, vector<8x128xf32>
    tpu.vector_store %arg3[%c24, %c0_2], %2 {strides = array<i32>} : memref<32x128xf32, #tpu.memory_space<vmem>>, vector<8x128xf32>,
    %c0_3 = arith.constant 0 : index
    %c0_4 = arith.constant 0 : index
    %4 = vector.load %arg1[%c0_3, %c0_4] : memref<16x128xf32, #tpu.memory_space<vmem>>, vector<16x128xf32>
    %c8 = arith.constant 8 : index
    %c0_5 = arith.constant 0 : index
    %5 = vector.load %arg3[%c8, %c0_5] : memref<32x128xf32, #tpu.memory_space<vmem>>, vector<16x128xf32>
    tpu.vector_store %arg3[%c8, %c0_5], %4 {strides = array<i32>} : memref<32x128xf32, #tpu.memory_space<vmem>>, vector<16x128xf32>,
    %c3 = arith.constant 3 : index
    %c0_6 = arith.constant 0 : index
    %6 = vector.load %arg3[%c3, %c0_6] : memref<32x128xf32, #tpu.memory_space<vmem>>, vector<16x128xf32>
    %cst_7 = arith.constant 0.00102838012 : f32
    %7 = vector.broadcast %cst_7 : f32 to vector<16x128xf32>
    %8 = arith.mulf %7, %6 : vector<16x128xf32>
    %c4 = arith.constant 4 : index
    %c0_8 = arith.constant 0 : index
    %9 = vector.load %arg3[%c4, %c0_8] : memref<32x128xf32, #tpu.memory_space<vmem>>, vector<16x128xf32>
    %cst_9 = arith.constant 0.00759875821 : f32
    %10 = vector.broadcast %cst_9 : f32 to vector<16x128xf32>
    %11 = arith.mulf %10, %9 : vector<16x128xf32>
    %12 = arith.addf %8, %11 : vector<16x128xf32>
    %c5 = arith.constant 5 : index
    %c0_10 = arith.constant 0 : index
    %13 = vector.load %arg3[%c5, %c0_10] : memref<32x128xf32, #tpu.memory_space<vmem>>, vector<16x128xf32>
    %cst_11 = arith.constant 0.0360007733 : f32
    %14 = vector.broadcast %cst_11 : f32 to vector<16x128xf32>
    %15 = arith.mulf %14, %13 : vector<16x128xf32>
    %16 = arith.addf %12, %15 : vector<16x128xf32>
    %c6 = arith.constant 6 : index
    %c0_12 = arith.constant 0 : index
    %17 = vector.load %arg3[%c6, %c0_12] : memref<32x128xf32, #tpu.memory_space<vmem>>, vector<16x128xf32>
    %cst_13 = arith.constant 0.109360687 : f32
    %18 = vector.broadcast %cst_13 : f32 to vector<16x128xf32>
    %19 = arith.mulf %18, %17 : vector<16x128xf32>
    %20 = arith.addf %16, %19 : vector<16x128xf32>
    %c7 = arith.constant 7 : index
    %c0_14 = arith.constant 0 : index
    %21 = vector.load %arg3[%c7, %c0_14] : memref<32x128xf32, #tpu.memory_space<vmem>>, vector<16x128xf32>
    %cst_15 = arith.constant 0.213005543 : f32
    %22 = vector.broadcast %cst_15 : f32 to vector<16x128xf32>
    %23 = arith.mulf %22, %21 : vector<16x128xf32>
    %24 = arith.addf %20, %23 : vector<16x128xf32>
    %c8_16 = arith.constant 8 : index
    %c0_17 = arith.constant 0 : index
    %25 = vector.load %arg3[%c8_16, %c0_17] : memref<32x128xf32, #tpu.memory_space<vmem>>, vector<16x128xf32>
    %cst_18 = arith.constant 0.266011715 : f32
    %26 = vector.broadcast %cst_18 : f32 to vector<16x128xf32>
    %27 = arith.mulf %26, %25 : vector<16x128xf32>
    %28 = arith.addf %24, %27 : vector<16x128xf32>
    %c9 = arith.constant 9 : index
    %c0_19 = arith.constant 0 : index
    %29 = vector.load %arg3[%c9, %c0_19] : memref<32x128xf32, #tpu.memory_space<vmem>>, vector<16x128xf32>
    %cst_20 = arith.constant 0.213005543 : f32
    %30 = vector.broadcast %cst_20 : f32 to vector<16x128xf32>
    %31 = arith.mulf %30, %29 : vector<16x128xf32>
    %32 = arith.addf %28, %31 : vector<16x128xf32>
    %c10 = arith.constant 10 : index
    %c0_21 = arith.constant 0 : index
    %33 = vector.load %arg3[%c10, %c0_21] : memref<32x128xf32, #tpu.memory_space<vmem>>, vector<16x128xf32>
    %cst_22 = arith.constant 0.109360687 : f32
    %34 = vector.broadcast %cst_22 : f32 to vector<16x128xf32>
    %35 = arith.mulf %34, %33 : vector<16x128xf32>
    %36 = arith.addf %32, %35 : vector<16x128xf32>
    %c11 = arith.constant 11 : index
    %c0_23 = arith.constant 0 : index
    %37 = vector.load %arg3[%c11, %c0_23] : memref<32x128xf32, #tpu.memory_space<vmem>>, vector<16x128xf32>
    %cst_24 = arith.constant 0.0360007733 : f32
    %38 = vector.broadcast %cst_24 : f32 to vector<16x128xf32>
    %39 = arith.mulf %38, %37 : vector<16x128xf32>
    %40 = arith.addf %36, %39 : vector<16x128xf32>
    %c12 = arith.constant 12 : index
    %c0_25 = arith.constant 0 : index
    %41 = vector.load %arg3[%c12, %c0_25] : memref<32x128xf32, #tpu.memory_space<vmem>>, vector<16x128xf32>
    %cst_26 = arith.constant 0.00759875821 : f32
    %42 = vector.broadcast %cst_26 : f32 to vector<16x128xf32>
    %43 = arith.mulf %42, %41 : vector<16x128xf32>
    %44 = arith.addf %40, %43 : vector<16x128xf32>
    %c13 = arith.constant 13 : index
    %c0_27 = arith.constant 0 : index
    %45 = vector.load %arg3[%c13, %c0_27] : memref<32x128xf32, #tpu.memory_space<vmem>>, vector<16x128xf32>
    %cst_28 = arith.constant 0.00102838012 : f32
    %46 = vector.broadcast %cst_28 : f32 to vector<16x128xf32>
    %47 = arith.mulf %46, %45 : vector<16x128xf32>
    %48 = arith.addf %44, %47 : vector<16x128xf32>
    %c0_29 = arith.constant 0 : index
    %c0_30 = arith.constant 0 : index
    %49 = vector.load %arg2[%c0_29, %c0_30] : memref<16x128xf32, #tpu.memory_space<vmem>>, vector<16x128xf32>
    tpu.vector_store %arg2[%c0_29, %c0_30], %48 {strides = array<i32>} : memref<16x128xf32, #tpu.memory_space<vmem>>, vector<16x128xf32>,
    return
  }
  func.func @transform_0(%arg0: i32) -> (i32, i32) {
    %c0_i32 = arith.constant 0 : i32
    %c0_i32_0 = arith.constant 0 : i32
    return %c0_i32, %arg0 : i32, i32
  }
  func.func @transform_1(%arg0: i32) -> (i32, i32) {
    %c0_i32 = arith.constant 0 : i32
    %c0_i32_0 = arith.constant 0 : i32
    return %c0_i32, %arg0 : i32, i32
  }
}

</mosaic_0001>

<llo_original>
// kernel: tpu_custom_call.1
$region0: #{tpu_custom_call.1}
  #allocation0 [shape = 'u32[]', space=smem, size = 0x4, offset = 0x4, fixed_abs, tag = 'smem constant byte address 0x4 - core index']
  #allocation1 [shape = 'u32[144,128]{1,0:T(1,128)}', space=vmem, size = 0x12000, scoped, tag = 'internal scratch']
  #allocation2 [shape = 'f32[32,128]{1,0:T(8,128)}', space=vmem, size = 0x4000, scoped, tag = 'scratch operand']
  %s0 = inlined_call_operand.hbm [shape: f32[16,128], index: 0, kind: input, shape index: {}]
  %s1 = inlined_call_operand.hbm [shape: f32[16,128], index: 1, kind: output, shape index: {}]
  %s2 = sld [smem:[#allocation0]]
  $region18: #{tpu_custom_call.1} parent=0
    _
  %s4 = ssub.s32 1, %s2
  %s5 = scalar_select 0, %s4, %s2
  $region1: #{tpu_custom_call.1} parent=0
    #allocation3 [shape = 'u8[8192]{0}', space=vmem, size = 0x2000, scoped, tag = 'input window, operand 0, single buffered']
    #allocation4 [shape = 's32[1]{0}', space=sflag, size = 0x4, scoped, tag = 'scoped memory for tpu_custom_call.1']
    #allocation5 [shape = 's32[1]{0}', space=sflag, size = 0x4, scoped, tag = 'scoped memory for tpu_custom_call.1']
    #allocation6 [shape = 'u8[8192]{0}', space=vmem, size = 0x2000, scoped, tag = 'output window, operand 0, single buffered']
    %6 = vsyncpa [#allocation4], 0
    %7 = vsyncpa [#allocation5], 0
    // Predicated region
    $region2: #{tpu_custom_call.1} parent=1 // pred_check
      _
    $region3: #{tpu_custom_call.1} parent=1 // pred_check_branch
      %9 = sbr.rel (0) target = $region5
    $region4: #{tpu_custom_call.1} parent=1 // pred_region
      %s11 = ssub.s32 256, 256
      %12 = vsyncadd [#allocation4], %s11
      %s13 = sshll.u32 [#allocation3], 4
      %s14 = int_to_ptr.vmem [resolvable:$true] %s13
      %19 = dma.hbm_to_vmem [thread:$0]  %s0, 256, %s14, [#allocation4], 128, 128, 8
    $region5: #{tpu_custom_call.1} parent=1 // pred_fallthru
      _
    // Predicated region
    $region6: #{tpu_custom_call.1} parent=1 // pred_check
      _
    $region7: #{tpu_custom_call.1} parent=1 // pred_check_branch
      %21 = sbr.rel (0) target = $region9
    $region8: #{tpu_custom_call.1} parent=1 // pred_region
      %22 = dma.done [#allocation4], 256
    $region9: #{tpu_custom_call.1} parent=1 // pred_fallthru
      _
    %23 = vst [vmem:[#allocation2] sm:$0xff] 0.0
    %24 = vst [vmem:[#allocation2 + $0x18] sm:$0xff] 0.0
    %v25 = vld [vmem:[#allocation3] sm:$0xff]
    %v26 = vld [vmem:[#allocation3 + $0x8] sm:$0xff]
    %27 = vst [vmem:[#allocation2 + $0x8] sm:$0xff] %v25
    %28 = vst [vmem:[#allocation2 + $0x10] sm:$0xff] %v26
    %v29 = vld [vmem:[#allocation2 + $0x3] sm:$0xff]
    %v30 = vld [vmem:[#allocation2 + $0xb] sm:$0xff]
    %v31 = vmul.f32 %v29, 0.0010283801
    %v32 = vmul.f32 %v30, 0.0010283801
    %v33 = vld [vmem:[#allocation2 + $0x4] sm:$0xff]
    %v34 = vld [vmem:[#allocation2 + $0xc] sm:$0xff]
    %v35 = vmul.f32 %v33, 0.007598758
    %v36 = vmul.f32 %v34, 0.007598758
    %v37 = vadd.f32 %v31, %v35
    %v38 = vadd.f32 %v32, %v36
    %v39 = vld [vmem:[#allocation2 + $0x5] sm:$0xff]
    %v40 = vld [vmem:[#allocation2 + $0xd] sm:$0xff]
    %v41 = vmul.f32 %v39, 0.036000773
    %v42 = vmul.f32 %v40, 0.036000773
    %v43 = vadd.f32 %v37, %v41
    %v44 = vadd.f32 %v38, %v42
    %v45 = vld [vmem:[#allocation2 + $0x6] sm:$0xff]
    %v46 = vld [vmem:[#allocation2 + $0xe] sm:$0xff]
    %v47 = vmul.f32 %v45, 0.10936069
    %v48 = vmul.f32 %v46, 0.10936069
    %v49 = vadd.f32 %v43, %v47
    %v50 = vadd.f32 %v44, %v48
    %v51 = vld [vmem:[#allocation2 + $0x7] sm:$0xff]
    %v52 = vld [vmem:[#allocation2 + $0xf] sm:$0xff]
    %v53 = vmul.f32 %v51, 0.21300554
    %v54 = vmul.f32 %v52, 0.21300554
    %v55 = vadd.f32 %v49, %v53
    %v56 = vadd.f32 %v50, %v54
    %v57 = vld [vmem:[#allocation2 + $0x8] sm:$0xff]
    %v58 = vld [vmem:[#allocation2 + $0x10] sm:$0xff]
    %v59 = vmul.f32 %v57, 0.26601171
    %v60 = vmul.f32 %v58, 0.26601171
    %v61 = vadd.f32 %v55, %v59
    %v62 = vadd.f32 %v56, %v60
    %v63 = vld [vmem:[#allocation2 + $0x9] sm:$0xff]
    %v64 = vld [vmem:[#allocation2 + $0x11] sm:$0xff]
    %v65 = vmul.f32 %v63, 0.21300554
    %v66 = vmul.f32 %v64, 0.21300554
    %v67 = vadd.f32 %v61, %v65
    %v68 = vadd.f32 %v62, %v66
    %v69 = vld [vmem:[#allocation2 + $0xa] sm:$0xff]
    %v70 = vld [vmem:[#allocation2 + $0x12] sm:$0xff]
    %v71 = vmul.f32 %v69, 0.10936069
    %v72 = vmul.f32 %v70, 0.10936069
    %v73 = vadd.f32 %v67, %v71
    %v74 = vadd.f32 %v68, %v72
    %v75 = vld [vmem:[#allocation2 + $0x13] sm:$0xff]
    %v76 = vmul.f32 %v30, 0.036000773
    %v77 = vmul.f32 %v75, 0.036000773
    %v78 = vadd.f32 %v73, %v76
    %v79 = vadd.f32 %v74, %v77
    %v80 = vld [vmem:[#allocation2 + $0x14] sm:$0xff]
    %v81 = vmul.f32 %v80, 0.007598758
    %v82 = vadd.f32 %v78, %v36
    %v83 = vadd.f32 %v79, %v81
    %v84 = vld [vmem:[#allocation2 + $0x15] sm:$0xff]
    %v85 = vmul.f32 %v40, 0.0010283801
    %v86 = vmul.f32 %v84, 0.0010283801
    %v87 = vadd.f32 %v82, %v85
    %v88 = vadd.f32 %v83, %v86
    %89 = vst [vmem:[#allocation6] sm:$0xff] %v87
    %90 = vst [vmem:[#allocation6 + $0x8] sm:$0xff] %v88
    // Predicated region
    $region10: #{tpu_custom_call.1} parent=1 // pred_check
      _
    $region11: #{tpu_custom_call.1} parent=1 // pred_check_branch
      %92 = sbr.rel (0) target = $region13
    $region12: #{tpu_custom_call.1} parent=1 // pred_region
      %s94 = ssub.s32 256, 256
      %95 = vsyncadd [#allocation5], %s94
      %s96 = sshll.u32 [#allocation6], 4
      %s97 = int_to_ptr.vmem [resolvable:$true] %s96
      %102 = dma.vmem_to_hbm [thread:$0]  %s97, 256, %s1, [#allocation5], 128, 128, 8
    $region13: #{tpu_custom_call.1} parent=1 // pred_fallthru
      _
    // Predicated region
    $region14: #{tpu_custom_call.1} parent=1 // pred_check
      _
    $region15: #{tpu_custom_call.1} parent=1 // pred_check_branch
      %104 = sbr.rel (0) target = $region17
    $region16: #{tpu_custom_call.1} parent=1 // pred_region
      %105 = dma.done [#allocation5], 256
    $region17: #{tpu_custom_call.1} parent=1 // pred_fallthru
      _
    %106 = vsyncpa [#allocation4], 1
    %107 = vsyncpa [#allocation5], 1

</llo_original>
